<compile_context>
chip_gen: v6e
topology: v6e:2x2x1
jax: 0.10.0
libtpu: 0.0.40
codegen_flags: <defaults>
</compile_context>

<pallas_src>
import functools

import jax
import jax.numpy as jnp
from jax.experimental import pallas as pl
from jax.experimental.pallas import tpu as pltpu


def _instance_loss_kernel(img_ref, txt_ref, lab_ref, o_ref, acc_ref, *,
                          batch_size, tb):
    s = pl.program_id(0)          # parallel split (megacore sharding on v7x)
    j = pl.program_id(1)          # batch-tile reduction axis ("arbitrary")

    @pl.when(j == 0)
    def _init():
        acc_ref[...] = jnp.zeros_like(acc_ref)

    labels = lab_ref[...]                                        # (TB, 1) int32
    tile_idx = s * pl.num_programs(1) + j
    row_ids = jax.lax.broadcasted_iota(jnp.int32, (tb, 1), 0) + tile_idx * tb
    valid = (row_ids < batch_size).astype(jnp.float32)           # (TB, 1)

    img = img_ref[...].astype(jnp.float32)                       # (TB, C)
    txt = txt_ref[...].astype(jnp.float32)                       # (TB, C)

    # Hoisted & shared between the two modalities (JAX does not CSE iota/bcast).
    cols = jax.lax.broadcasted_iota(jnp.int32, img.shape, 1)     # (TB, C)
    onehot = cols == labels                                      # (TB, C) bool

    def nll(logits):
        # Per-row CE term: logsumexp(row) - row[label].
        m = jnp.max(logits, axis=1, keepdims=True)               # (TB, 1)
        lse = m + jnp.log(jnp.sum(jnp.exp(logits - m), axis=1, keepdims=True))
        tgt = jnp.sum(jnp.where(onehot, logits, 0.0), axis=1, keepdims=True)
        return lse - tgt                                         # (TB, 1)

    # Per-row accumulation into VMEM scratch: pure VPU adds, no per-step
    # cross-sublane reduce and no masked (1,1) read-modify-write.
    acc_ref[...] += (nll(img) + nll(txt)) * valid

    @pl.when(j == pl.num_programs(1) - 1)
    def _finalize():
        o_ref[...] = jnp.sum(acc_ref[...], axis=0, keepdims=True)   # (1, 1)


def _choose_tb(batch, num_classes, itemsize, pipeline_budget_bytes=32 << 20):
    # 2 inputs x 2 pipeline buffers x TB x C x itemsize must fit the budget.
    max_rows = pipeline_budget_bytes // max(1, 4 * num_classes * itemsize)
    tb = (max_rows // 8) * 8
    tb = max(8, min(1024, tb))
    padded_batch = ((batch + 7) // 8) * 8
    return min(tb, max(8, padded_batch))


def instance_loss(img_cls, txt_cls, labels, *, tb=None):
    """CrossEntropy(img_cls, labels) + CrossEntropy(txt_cls, labels)."""
    B, C = img_cls.shape
    itemsize = jnp.dtype(img_cls.dtype).itemsize
    if tb is None:
        tb = _choose_tb(B, C, itemsize)

    n_tiles_total = pl.cdiv(B, tb)
    num_splits = 2 if n_tiles_total >= 2 else 1      # use both TCs on v7x
    tiles_per_split = pl.cdiv(n_tiles_total, num_splits)
    Bp = num_splits * tiles_per_split * tb
    pad = Bp - B

    img, txt = img_cls, txt_cls
    lab = labels.astype(jnp.int32)
    if pad:
        # Only touch HBM when the batch is ragged; padded rows (zero logits,
        # label -1) are masked to exactly 0 inside the kernel.
        img = jnp.pad(img, ((0, pad), (0, 0)))
        txt = jnp.pad(txt, ((0, pad), (0, 0)))
        lab = jnp.pad(lab, (0, pad), constant_values=-1)
    lab = lab.reshape(Bp, 1)

    # 2 inputs x 2 pipeline buffers + labels (double-buffered) + scratch acc.
    footprint = 4 * tb * C * itemsize + 2 * tb * 4 + tb * 4
    vmem_limit = int(min(48 << 20,
                         max(footprint * 3 // 2 + (1 << 16), 4 << 20)))

    kernel = functools.partial(_instance_loss_kernel, batch_size=B, tb=tb)
    tps = tiles_per_split

    partials = pl.pallas_call(
        kernel,
        out_shape=jax.ShapeDtypeStruct((num_splits, 1), jnp.float32),
        grid=(num_splits, tiles_per_split),
        in_specs=[
            pl.BlockSpec((tb, C), lambda s, j: (s * tps + j, 0)),
            pl.BlockSpec((tb, C), lambda s, j: (s * tps + j, 0)),
            pl.BlockSpec((tb, 1), lambda s, j: (s * tps + j, 0)),
        ],
        out_specs=pl.BlockSpec((1, 1), lambda s, j: (s, 0)),
        scratch_shapes=[pltpu.VMEM((tb, 1), jnp.float32)],
        compiler_params=pltpu.CompilerParams(
            dimension_semantics=("parallel", "arbitrary"),
            vmem_limit_bytes=vmem_limit),
    )(img, txt, lab)

    # 'mean' reduction for both CE terms (padded rows contributed 0).
    return jnp.sum(partials) * (1.0 / B)


def reference(img_cls, txt_cls, labels):
    """Pure-JAX mirror of the PyTorch forward."""
    def ce(logits, y):
        logp = jax.nn.log_softmax(logits.astype(jnp.float32), axis=-1)
        nll = -jnp.take_along_axis(logp, y[:, None], axis=1)[:, 0]
        return jnp.mean(nll)
    return ce(img_cls, labels) + ce(txt_cls, labels)


if __name__ == "__main__":
    key = jax.random.PRNGKey(0)
    B, C = 4, 30                      # small: batch=4, num_classes=30
    k_img, k_txt, k_lab = jax.random.split(key, 3)

    img_cls = jax.random.normal(k_img, (B, C), dtype=jnp.float32)
    txt_cls = jax.random.normal(k_txt, (B, C), dtype=jnp.float32)
    labels = jax.random.randint(k_lab, (B,), 0, C, dtype=jnp.int32)

    loss = instance_loss(img_cls, txt_cls, labels)
    loss = jax.block_until_ready(loss)

    ref = reference(img_cls, txt_cls, labels)
    assert loss.shape == ()
    assert jnp.allclose(loss, ref, rtol=1e-5, atol=1e-5), (float(loss), float(ref))

    print("KERNEL_OK")
</pallas_src>

<mosaic_0001>
module attributes {stable_mosaic.version = 11 : i64} {
  func.func @_instance_loss_kernel(%arg0: i32, %arg1: i32, %arg2: memref<8x30xf32, #tpu.memory_space<vmem>>, %arg3: memref<8x30xf32, #tpu.memory_space<vmem>>, %arg4: memref<8x1xi32, #tpu.memory_space<vmem>>, %arg5: memref<1x1xf32, #tpu.memory_space<vmem>>, %arg6: memref<8x1xf32, #tpu.memory_space<vmem>>) attributes {dimension_semantics = [#tpu.dimension_semantics<parallel>, #tpu.dimension_semantics<arbitrary>], iteration_bounds = array<i64: 1, 1>, scalar_prefetch = 0 : i64, scratch_operands = 1 : i64, tpu.core_type = #tpu.core_type<tc>, window_params = [{transform_indices = @transform_0, window_bounds = array<i64: 8, 30>}, {transform_indices = @transform_1, window_bounds = array<i64: 8, 30>}, {transform_indices = @transform_2, window_bounds = array<i64: 8, 1>}, {transform_indices = @transform_3, window_bounds = array<i64: 1, 1>}]} {
    %c0_i32 = arith.constant 0 : i32
    %0 = arith.cmpi eq, %arg1, %c0_i32 : i32
    %1 = arith.extui %0 : i1 to i32
    %c0_i32_0 = arith.constant 0 : i32
    %2 = arith.cmpi ne, %1, %c0_i32_0 : i32
    scf.if %2 {
      %cst_19 = arith.constant 0.000000e+00 : f32
      %55 = vector.broadcast %cst_19 : f32 to vector<8x1xf32>
      %c0_20 = arith.constant 0 : index
      %c0_21 = arith.constant 0 : index
      %56 = vector.load %arg6[%c0_20, %c0_21] : memref<8x1xf32, #tpu.memory_space<vmem>>, vector<8x1xf32>
      tpu.vector_store %arg6[%c0_20, %c0_21], %55 {strides = array<i32>} : memref<8x1xf32, #tpu.memory_space<vmem>>, vector<8x1xf32>,
    } else {
    }
    %c0 = arith.constant 0 : index
    %c0_1 = arith.constant 0 : index
    %3 = vector.load %arg4[%c0, %c0_1] : memref<8x1xi32, #tpu.memory_space<vmem>>, vector<8x1xi32>
    %c1_i32 = arith.constant 1 : i32
    %4 = arith.muli %arg0, %c1_i32 : i32
    %5 = arith.addi %4, %arg1 : i32
    %6 = tpu.iota {dimensions = array<i32: 0>} : vector<8x1xi32>
    %c8_i32 = arith.constant 8 : i32
    %7 = arith.muli %5, %c8_i32 : i32
    %8 = vector.broadcast %7 : i32 to vector<8x1xi32>
    %9 = arith.addi %6, %8 : vector<8x1xi32>
    %c4_i32 = arith.constant 4 : i32
    %10 = vector.broadcast %c4_i32 : i32 to vector<8x1xi32>
    %11 = arith.cmpi slt, %9, %10 : vector<8x1xi32>
    %12 = arith.extui %11 : vector<8x1xi1> to vector<8x1xi32>
    %13 = arith.sitofp %12 : vector<8x1xi32> to vector<8x1xf32>
    %c0_2 = arith.constant 0 : index
    %c0_3 = arith.constant 0 : index
    %14 = vector.load %arg2[%c0_2, %c0_3] : memref<8x30xf32, #tpu.memory_space<vmem>>, vector<8x30xf32>
    %c0_4 = arith.constant 0 : index
    %c0_5 = arith.constant 0 : index
    %15 = vector.load %arg3[%c0_4, %c0_5] : memref<8x30xf32, #tpu.memory_space<vmem>>, vector<8x30xf32>
    %16 = tpu.iota {dimensions = array<i32: 1>} : vector<8x30xi32>
    %17 = vector.broadcast %3 : vector<8x1xi32> to vector<8x30xi32>
    %18 = arith.cmpi eq, %16, %17 : vector<8x30xi32>
    %c0_6 = arith.constant 0 : index
    %c0_7 = arith.constant 0 : index
    %19 = vector.load %arg6[%c0_6, %c0_7] : memref<8x1xf32, #tpu.memory_space<vmem>>, vector<8x1xf32>
    %cst = arith.constant dense<0xFF800000> : vector<8xf32>
    %20 = vector.multi_reduction <maximumf>, %14, %cst [1] : vector<8x30xf32> to vector<8xf32>
    %21 = vector.shape_cast %20 : vector<8xf32> to vector<8x1xf32>
    %22 = vector.broadcast %21 : vector<8x1xf32> to vector<8x30xf32>
    %23 = arith.subf %14, %22 : vector<8x30xf32>
    %24 = math.exp %23 : vector<8x30xf32>
    %cst_8 = arith.constant dense<0.000000e+00> : vector<8xf32>
    %25 = vector.multi_reduction <add>, %24, %cst_8 [1] : vector<8x30xf32> to vector<8xf32>
    %26 = vector.shape_cast %25 : vector<8xf32> to vector<8x1xf32>
    %27 = math.log %26 : vector<8x1xf32>
    %28 = arith.addf %21, %27 : vector<8x1xf32>
    %cst_9 = arith.constant 0.000000e+00 : f32
    %29 = vector.broadcast %cst_9 : f32 to vector<8x30xf32>
    %30 = arith.select %18, %14, %29 : vector<8x30xi1>, vector<8x30xf32>
    %cst_10 = arith.constant dense<0.000000e+00> : vector<8xf32>
    %31 = vector.multi_reduction <add>, %30, %cst_10 [1] : vector<8x30xf32> to vector<8xf32>
    %32 = vector.shape_cast %31 : vector<8xf32> to vector<8x1xf32>
    %33 = arith.subf %28, %32 : vector<8x1xf32>
    %cst_11 = arith.constant dense<0xFF800000> : vector<8xf32>
    %34 = vector.multi_reduction <maximumf>, %15, %cst_11 [1] : vector<8x30xf32> to vector<8xf32>
    %35 = vector.shape_cast %34 : vector<8xf32> to vector<8x1xf32>
    %36 = vector.broadcast %35 : vector<8x1xf32> to vector<8x30xf32>
    %37 = arith.subf %15, %36 : vector<8x30xf32>
    %38 = math.exp %37 : vector<8x30xf32>
    %cst_12 = arith.constant dense<0.000000e+00> : vector<8xf32>
    %39 = vector.multi_reduction <add>, %38, %cst_12 [1] : vector<8x30xf32> to vector<8xf32>
    %40 = vector.shape_cast %39 : vector<8xf32> to vector<8x1xf32>
    %41 = math.log %40 : vector<8x1xf32>
    %42 = arith.addf %35, %41 : vector<8x1xf32>
    %cst_13 = arith.constant 0.000000e+00 : f32
    %43 = vector.broadcast %cst_13 : f32 to vector<8x30xf32>
    %44 = arith.select %18, %15, %43 : vector<8x30xi1>, vector<8x30xf32>
    %cst_14 = arith.constant dense<0.000000e+00> : vector<8xf32>
    %45 = vector.multi_reduction <add>, %44, %cst_14 [1] : vector<8x30xf32> to vector<8xf32>
    %46 = vector.shape_cast %45 : vector<8xf32> to vector<8x1xf32>
    %47 = arith.subf %42, %46 : vector<8x1xf32>
    %48 = arith.addf %33, %47 : vector<8x1xf32>
    %49 = arith.mulf %48, %13 : vector<8x1xf32>
    %50 = arith.addf %19, %49 : vector<8x1xf32>
    %c0_15 = arith.constant 0 : index
    %c0_16 = arith.constant 0 : index
    %51 = vector.load %arg6[%c0_15, %c0_16] : memref<8x1xf32, #tpu.memory_space<vmem>>, vector<8x1xf32>
    tpu.vector_store %arg6[%c0_15, %c0_16], %50 {strides = array<i32>} : memref<8x1xf32, #tpu.memory_space<vmem>>, vector<8x1xf32>,
    %c0_i32_17 = arith.constant 0 : i32
    %52 = arith.cmpi eq, %arg1, %c0_i32_17 : i32
    %53 = arith.extui %52 : i1 to i32
    %c0_i32_18 = arith.constant 0 : i32
    %54 = arith.cmpi ne, %53, %c0_i32_18 : i32
    scf.if %54 {
      %c0_19 = arith.constant 0 : index
      %c0_20 = arith.constant 0 : index
      %55 = vector.load %arg6[%c0_19, %c0_20] : memref<8x1xf32, #tpu.memory_space<vmem>>, vector<8x1xf32>
      %cst_21 = arith.constant dense<0.000000e+00> : vector<1xf32>
      %56 = vector.multi_reduction <add>, %55, %cst_21 [0] : vector<8x1xf32> to vector<1xf32>
      %57 = vector.shape_cast %56 : vector<1xf32> to vector<1x1xf32>
      %c0_22 = arith.constant 0 : index
      %c0_23 = arith.constant 0 : index
      %58 = vector.load %arg5[%c0_22, %c0_23] : memref<1x1xf32, #tpu.memory_space<vmem>>, vector<1x1xf32>
      tpu.vector_store %arg5[%c0_22, %c0_23], %57 {strides = array<i32>} : memref<1x1xf32, #tpu.memory_space<vmem>>, vector<1x1xf32>,
    } else {
    }
    return
  }
  func.func @transform_0(%arg0: i32, %arg1: i32) -> (i32, i32) {
    %c1_i32 = arith.constant 1 : i32
    %0 = arith.muli %arg0, %c1_i32 : i32
    %1 = arith.addi %0, %arg1 : i32
    %c0_i32 = arith.constant 0 : i32
    %c0_i32_0 = arith.constant 0 : i32
    return %1, %c0_i32 : i32, i32
  }
  func.func @transform_1(%arg0: i32, %arg1: i32) -> (i32, i32) {
    %c1_i32 = arith.constant 1 : i32
    %0 = arith.muli %arg0, %c1_i32 : i32
    %1 = arith.addi %0, %arg1 : i32
    %c0_i32 = arith.constant 0 : i32
    %c0_i32_0 = arith.constant 0 : i32
    return %1, %c0_i32 : i32, i32
  }
  func.func @transform_2(%arg0: i32, %arg1: i32) -> (i32, i32) {
    %c1_i32 = arith.constant 1 : i32
    %0 = arith.muli %arg0, %c1_i32 : i32
    %1 = arith.addi %0, %arg1 : i32
    %c0_i32 = arith.constant 0 : i32
    %c0_i32_0 = arith.constant 0 : i32
    return %1, %c0_i32 : i32, i32
  }
  func.func @transform_3(%arg0: i32, %arg1: i32) -> (i32, i32) {
    %c0_i32 = arith.constant 0 : i32
    %c0_i32_0 = arith.constant 0 : i32
    return %arg0, %c0_i32 : i32, i32
  }
}

</mosaic_0001>

<llo_original>
// kernel: tpu_custom_call.1
$region0: #{tpu_custom_call.1}
  #allocation0 [shape = 'u32[]', space=smem, size = 0x4, offset = 0x4, fixed_abs, tag = 'smem constant byte address 0x4 - core index']
  #allocation1 [shape = 'u32[144,128]{1,0:T(1,128)}', space=vmem, size = 0x12000, scoped, tag = 'internal scratch']
  #allocation2 [shape = 'f32[8,1]{1,0:T(8,128)}', space=vmem, size = 0x1000, scoped, tag = 'scratch operand']
  %s0 = inlined_call_operand.vmem [shape: f32[8,30], index: 0, kind: input, shape index: {}]
  %s1 = inlined_call_operand.hbm [shape: f32[8,30], index: 1, kind: input, shape index: {}]
  %s2 = inlined_call_operand.vmem [shape: s32[8,1], index: 2, kind: input, shape index: {}]
  %s3 = inlined_call_operand.hbm [shape: f32[1,1], index: 3, kind: output, shape index: {}]
  %s4 = sld [smem:[#allocation0]]
  $region34: #{tpu_custom_call.1} parent=0
    _
  %s6 = ssub.s32 1, %s4
  %s7 = scalar_select 0, %s6, %s4
  $region1: #{tpu_custom_call.1} parent=0
    #allocation3 [shape = 'u8[4096]{0}', space=vmem, size = 0x1000, scoped, tag = 'input window, operand 1, single buffered']
    #allocation4 [shape = 's32[1]{0}', space=sflag, size = 0x4, scoped, tag = 'scoped memory for tpu_custom_call.1']
    #allocation5 [shape = 's32[1]{0}', space=sflag, size = 0x4, scoped, tag = 'scoped memory for tpu_custom_call.1']
    #allocation6 [shape = 'u8[512]{0}', space=vmem, size = 0x400, scoped, tag = 'output window, operand 0, single buffered']
    %8 = vsyncpa [#allocation4], 0
    %9 = vsyncpa [#allocation5], 0
    // Predicated region
    $region2: #{tpu_custom_call.1} parent=1 // pred_check
      _
    $region3: #{tpu_custom_call.1} parent=1 // pred_check_branch
      %11 = sbr.rel (0) target = $region5
    $region4: #{tpu_custom_call.1} parent=1 // pred_region
      %s12 = sadd.s32 0, 0
      %p13 = scmp.lt.s32.totalorder %s12, 0
      %s14 = scalar_select %p13, %s12, 0
      %s15 = smul.addr %s14, 8
      %s16 = scalar_lea.vmem %s0, %s15
      %s17 = sadd.s32 0, 0
    $region5: #{tpu_custom_call.1} parent=1 // pred_fallthru
      _
    // Predicated region
    $region6: #{tpu_custom_call.1} parent=1 // pred_check
      _
    $region7: #{tpu_custom_call.1} parent=1 // pred_check_branch
      %19 = sbr.rel (0) target = $region9
    $region8: #{tpu_custom_call.1} parent=1 // pred_region
      %s20 = sadd.s32 0, 0
      %s22 = ssub.s32 128, 128
      %23 = vsyncadd [#allocation4], %s22
      %s24 = smul.addr %s20, 128
      %s25 = scalar_lea.hbm %s1, %s24
      %s27 = sshll.u32 [#allocation3], 4
      %s28 = int_to_ptr.vmem [resolvable:$true] %s27
      %30 = dma.hbm_to_vmem [thread:$0]  %s25, 128, %s28, [#allocation4]
    $region9: #{tpu_custom_call.1} parent=1 // pred_fallthru
      _
    // Predicated region
    $region10: #{tpu_custom_call.1} parent=1 // pred_check
      _
    $region11: #{tpu_custom_call.1} parent=1 // pred_check_branch
      %32 = sbr.rel (0) target = $region13
    $region12: #{tpu_custom_call.1} parent=1 // pred_region
      %s33 = sadd.s32 0, 0
      %p34 = scmp.lt.s32.totalorder %s33, 0
      %s35 = scalar_select %p34, %s33, 0
      %s36 = smul.addr %s35, 8
      %s37 = scalar_lea.vmem %s2, %s36
      %s38 = sadd.s32 0, 0
    $region13: #{tpu_custom_call.1} parent=1 // pred_fallthru
      _
    // Predicated region
    $region14: #{tpu_custom_call.1} parent=1 // pred_check
      _
    $region15: #{tpu_custom_call.1} parent=1 // pred_check_branch
      %40 = sbr.rel (0) target = $region17
    $region16: #{tpu_custom_call.1} parent=1 // pred_region
      %41 = dma.done [#allocation4], 128
    $region17: #{tpu_custom_call.1} parent=1 // pred_fallthru
      _
    %s42 = sadd.s32 0, 0
    %p43 = scmp.lt.s32.totalorder %s42, 0
    %s44 = scalar_select %p43, %s42, 0
    %s45 = smul.addr %s44, 8
    %s46 = scalar_lea.vmem %s0, %s45
    %s47 = sadd.s32 0, 0
    %p48 = scmp.lt.s32.totalorder %s47, 0
    %s49 = scalar_select %p48, %s47, 0
    %s50 = smul.addr %s49, 8
    %s51 = scalar_lea.vmem %s2, %s50
    %s52 = sadd.s32 0, 0
    %p53 = scmp.lt.s32.totalorder %s52, 0
    %s54 = scalar_select %p53, %s52, 0
    %s55 = smul.addr %s54, 8
    %s56 = scalar_lea.vmem %s0, %s55
    %s57 = sadd.s32 0, 0
    %s58 = sadd.s32 0, 0
    %s59 = sadd.s32 0, 0
    %p60 = scmp.lt.s32.totalorder %s59, 0
    %s61 = scalar_select %p60, %s59, 0
    %s62 = smul.addr %s61, 8
    %s63 = scalar_lea.vmem %s2, %s62
    %s64 = sadd.s32 0, 0
    %p65 = scmp.eq.s32.totalorder 0, 0
    // Predicated region
    $region18: #{tpu_custom_call.1} parent=1 // pred_check
      %p66 = pneg %p65
    $region19: #{tpu_custom_call.1} parent=1 // pred_check_branch
      %68 = sbr.rel (%p66) target = $region21
    $region20: #{tpu_custom_call.1} parent=1 // pred_region
      %vm69 = vcmask 7168
      %70 = vst.msk [vmem:[#allocation2] sm:$0xff] %vm69, 0.0
    $region21: #{tpu_custom_call.1} parent=1 // pred_fallthru
      _
    %v71 = vld [vmem:[%s63] sm:$0xff]
    %s72 = sadd.s32 0, 0
    %v73 = vlaneseq
    %v74 = vshrl.u32 %v73, 7
    %s75 = smul.u32 %s72, 8
    %v76 = vstv %s75
    %v77 = vadd.s32 %v74, %v76
    %vm78 = vcmp.lt.s32.totalorder %v77, 4
    %v79 = vsel %vm78, 1, 0
    %v80 = vcvt.s32.f32 %v79
    %v81 = vld [vmem:[%s56] sm:$0xff]
    %v82 = vld [vmem:[#allocation3] sm:$0xff]
    %v83 = vlaneseq
    %v84 = vand.u32 %v83, 127
    %85 = vset.pattern.permute.xlu0 0
    %86 = vperm.xlu0 %85, %v71
    %v87 = vpop.permute.xlu0 %86
    %vm88 = vcmp.eq.s32.totalorder %v84, %v87
    %v89 = vld [vmem:[#allocation2] sm:$0xff]
    %vm90 = vcmask 244736
    %v91 = vsel %vm90, %v81, -inf
    %92 = vmax.xlane.f32.xlu0 %v91
    %v93 = vpop.xlane.xlu0 %92
    %v94 = vsub.f32 %v81, %v93
    %v95 = vmul.f32 %v94, 1.442695
    %v96 = vpow.pop %v95
    %v97 = vsel %vm90, %v96, 0.0
    %98 = vadd.xlane.f32.xlu0 %v97
    %v99 = vpop.xlane.xlu0 %98
    %v100 = vlog2.pop %v99
    %v101 = vmul.f32 %v100, 0.6931472
    %v102 = vadd.f32 %v93, %v101
    %v103 = vsel %vm88, %v81, 0.0
    %v104 = vsel %vm90, %v103, 0.0
    %105 = vadd.xlane.f32.xlu0 %v104
    %v106 = vpop.xlane.xlu0 %105
    %v107 = vsub.f32 %v102, %v106
    %v108 = vsel %vm90, %v82, -inf
    %109 = vmax.xlane.f32.xlu0 %v108
    %v110 = vpop.xlane.xlu0 %109
    %v111 = vsub.f32 %v82, %v110
    %v112 = vmul.f32 %v111, 1.442695
    %v113 = vpow.pop %v112
    %v114 = vsel %vm90, %v113, 0.0
    %115 = vadd.xlane.f32.xlu0 %v114
    %v116 = vpop.xlane.xlu0 %115
    %v117 = vlog2.pop %v116
    %v118 = vmul.f32 %v117, 0.6931472
    %v119 = vadd.f32 %v110, %v118
    %v120 = vsel %vm88, %v82, 0.0
    %v121 = vsel %vm90, %v120, 0.0
    %122 = vadd.xlane.f32.xlu0 %v121
    %v123 = vpop.xlane.xlu0 %122
    %v124 = vsub.f32 %v119, %v123
    %v125 = vadd.f32 %v107, %v124
    %v126 = vmul.f32 %v125, %v80
    %v127 = vadd.f32 %v89, %v126
    %vm128 = vcmask 7168
    %129 = vst.msk [vmem:[#allocation2] sm:$0xff] %vm128, %v127
    // Predicated region
    $region22: #{tpu_custom_call.1} parent=1 // pred_check
      %p130 = pneg %p65
    $region23: #{tpu_custom_call.1} parent=1 // pred_check_branch
      %132 = sbr.rel (%p130) target = $region25
    $region24: #{tpu_custom_call.1} parent=1 // pred_region
      %v133 = vld [vmem:[#allocation2] sm:$0xff]
      %v134 = vsel %vm128, %v133, 0.0
      %v135 = vrot.slane %v134, 4
      %v136 = vadd.f32 %v134, %v135
      %v137 = vrot.slane %v136, 2
      %v138 = vadd.f32 %v136, %v137
      %v139 = vrot.slane %v138, 1
      %v140 = vadd.f32 %v138, %v139
      %vm141 = vcmask 0
      %142 = vst.msk [vmem:[#allocation6] sm:$0x1] %vm141, %v140
    $region25: #{tpu_custom_call.1} parent=1 // pred_fallthru
      _
    // Predicated region
    $region26: #{tpu_custom_call.1} parent=1 // pred_check
      _
    $region27: #{tpu_custom_call.1} parent=1 // pred_check_branch
      %144 = sbr.rel (0) target = $region29
    $region28: #{tpu_custom_call.1} parent=1 // pred_region
      %s146 = ssub.s32 16, 16
      %147 = vsyncadd [#allocation5], %s146
      %s149 = sshll.u32 [#allocation6], 4
      %s150 = int_to_ptr.vmem [resolvable:$true] %s149
      %152 = dma.vmem_to_hbm [thread:$0]  %s150, 16, %s3, [#allocation5]
    $region29: #{tpu_custom_call.1} parent=1 // pred_fallthru
      _
    // Predicated region
    $region30: #{tpu_custom_call.1} parent=1 // pred_check
      _
    $region31: #{tpu_custom_call.1} parent=1 // pred_check_branch
      %154 = sbr.rel (0) target = $region33
    $region32: #{tpu_custom_call.1} parent=1 // pred_region
      %155 = dma.done [#allocation5], 16
    $region33: #{tpu_custom_call.1} parent=1 // pred_fallthru
      _
    %156 = vsyncpa [#allocation4], 1
    %157 = vsyncpa [#allocation5], 1

</llo_original>
